<compile_context>
chip_gen: v5e
topology: v5e:2x2
jax: 0.10.0
libtpu: 0.0.40
codegen_flags: <defaults>
</compile_context>

<pallas_src>
import functools

import jax
import jax.numpy as jnp
from jax.experimental import pallas as pl
from jax.experimental.pallas import tpu as pltpu


def _rup(x, m):
    return -(-x // m) * m


# ----------------------------------------------------------------------------
# Fused Pallas kernel: conv1x1 matmul + BN batch stats + BN affine apply.
# ----------------------------------------------------------------------------
def _fused_mapping_kernel(w_ref, x_ref, g_ref, b_ref, o_ref, *, inv_count, eps):
    # w: (Cop, Kp) f32   x: (Kp, Lp) f32 (zero-padded)   g, b: (Cop, 1) f32
    # o: (Cop, Lp) f32
    wb = w_ref[...].astype(jnp.bfloat16)
    xb = x_ref[...].astype(jnp.bfloat16)
    # MXU matmul with f32 accumulation.
    y = jnp.dot(wb, xb, preferred_element_type=jnp.float32)      # (Cop, Lp) f32

    # Per-channel batch statistics straight from the f32 accumulator.
    # Zero-padded lanes / channels contribute exactly 0 to both sums, so
    # dividing by the true element count (N*H*W) is exact.
    s = jnp.sum(y, axis=1, keepdims=True)                         # (Cop, 1)
    ss = jnp.sum(y * y, axis=1, keepdims=True)                    # (Cop, 1)
    mean = s * inv_count
    var = ss * inv_count - mean * mean                            # biased var (PyTorch BN fwd)

    scale = g_ref[...] * jax.lax.rsqrt(var + eps)                 # EUP rsqrt
    bias = b_ref[...] - mean * scale
    o_ref[...] = y * scale + bias                                 # lane-dense store


# ----------------------------------------------------------------------------
# Mapping forward:  preconv (1x1, no bias) -> BatchNorm2d (training-mode stats)
# ----------------------------------------------------------------------------
def mapping_forward(params, x, *, eps=1e-5):
    N, Cin, H, W = x.shape
    w = params["conv_w"].reshape(params["conv_w"].shape[0], -1).astype(jnp.float32)
    Cout = w.shape[0]
    HW = H * W
    L = N * HW

    # Padded sizes: lanes to 128, K to 16 (bf16 sublane packing), Cout to 8.
    Lp = _rup(L, 128)
    Kp = _rup(Cin, 16)
    Cop = _rup(Cout, 8)

    # One cheap XLA transpose+pad to a lane-dense (Kp, N*HW) slab; bf16 cast
    # happens inside the kernel.
    xt = jnp.transpose(x.astype(jnp.float32).reshape(N, Cin, HW), (1, 0, 2))
    xt = xt.reshape(Cin, L)
    x_p = jnp.pad(xt, ((0, Kp - Cin), (0, Lp - L)))

    w_p = jnp.pad(w, ((0, Cop - Cout), (0, Kp - Cin)))
    g_p = jnp.pad(params["gamma"].astype(jnp.float32), (0, Cop - Cout)).reshape(Cop, 1)
    b_p = jnp.pad(params["beta"].astype(jnp.float32), (0, Cop - Cout)).reshape(Cop, 1)

    kernel = functools.partial(_fused_mapping_kernel,
                               inv_count=float(1.0 / L), eps=float(eps))

    # Tight VMEM budget computed from the actual operand/output sizes.
    bytes_in = (w_p.size + x_p.size + g_p.size + b_p.size) * 4
    bytes_out = Cop * Lp * 4
    vmem_limit = int(min(max(2 * (bytes_in + 2 * bytes_out) + (2 << 20), 8 << 20),
                         64 << 20))

    flops = 2 * Cop * Kp * Lp + 6 * Cop * Lp

    out_p = pl.pallas_call(
        kernel,
        out_shape=jax.ShapeDtypeStruct((Cop, Lp), jnp.float32),
        grid=(1,),
        in_specs=[
            pl.BlockSpec((Cop, Kp), lambda i: (0, 0)),   # weight (resident)
            pl.BlockSpec((Kp, Lp), lambda i: (0, 0)),    # activations, lane-dense
            pl.BlockSpec((Cop, 1), lambda i: (0, 0)),    # gamma
            pl.BlockSpec((Cop, 1), lambda i: (0, 0)),    # beta
        ],
        out_specs=pl.BlockSpec((Cop, Lp), lambda i: (0, 0)),
        compiler_params=pltpu.CompilerParams(
            dimension_semantics=("arbitrary",),
            vmem_limit_bytes=vmem_limit),
        cost_estimate=pl.CostEstimate(flops=flops, transcendentals=Cop,
                                      bytes_accessed=bytes_in + bytes_out),
    )(w_p, x_p, g_p, b_p)

    # Drop padding and restore NCHW with one cheap XLA transpose.
    out = out_p[:Cout, :L].reshape(Cout, N, HW)
    # TODO(synk): PyTorch BatchNorm2d in train mode also updates
    # running_mean/running_var (unbiased var, momentum); only the returned
    # activation is computed here, matching the module's forward output.
    return jnp.transpose(out, (1, 0, 2)).reshape(N, Cout, H, W)


# ----------------------------------------------------------------------------
def _reference(params, x):
    # Pure-JAX f32 reference of Mapping.forward (training-mode BN).
    w = params["conv_w"][:, :, 0, 0]
    y = jnp.einsum("oc,nchw->nohw", w, x)
    mean = jnp.mean(y, axis=(0, 2, 3), keepdims=True)
    var = jnp.var(y, axis=(0, 2, 3), keepdims=True)
    yn = (y - mean) * jax.lax.rsqrt(var + 1e-5)
    return (params["gamma"].reshape(1, -1, 1, 1) * yn
            + params["beta"].reshape(1, -1, 1, 1))


# ----------------------------------------------------------------------------
if __name__ == "__main__":
    # Mapping(in_dimension=100, out_dimension=64) on a (B, 100, 16, 16) input.
    IN_DIM, OUT_DIM = 100, 64
    B, H, W = 4, 16, 16

    key = jax.random.PRNGKey(0)
    kw, kx = jax.random.split(key)
    params = dict(
        conv_w=jax.random.normal(kw, (OUT_DIM, IN_DIM, 1, 1), jnp.float32)
        / jnp.sqrt(float(IN_DIM)),
        gamma=jnp.ones((OUT_DIM,), jnp.float32),   # PyTorch BatchNorm2d defaults
        beta=jnp.zeros((OUT_DIM,), jnp.float32),
    )
    x = jax.random.normal(kx, (B, IN_DIM, H, W), jnp.float32)

    fwd = jax.jit(mapping_forward)
    out = jax.block_until_ready(fwd(params, x))

    assert out.shape == (B, OUT_DIM, H, W), out.shape
    assert bool(jnp.all(jnp.isfinite(out)))
    ref = _reference(params, x)
    max_err = float(jnp.max(jnp.abs(out - ref)))
    # bf16 MXU inputs with f32 accumulation: small, bounded drift vs f32 ref.
    assert max_err < 0.1, max_err
    print("KERNEL_OK")
</pallas_src>

<mosaic_0001>
module attributes {stable_mosaic.version = 11 : i64} {
  func.func @_fused_mapping_kernel(%arg0: i32, %arg1: memref<64x112xf32, #tpu.memory_space<vmem>>, %arg2: memref<112x1024xf32, #tpu.memory_space<vmem>>, %arg3: memref<64x1xf32, #tpu.memory_space<vmem>>, %arg4: memref<64x1xf32, #tpu.memory_space<vmem>>, %arg5: memref<64x1024xf32, #tpu.memory_space<vmem>>) attributes {dimension_semantics = [#tpu.dimension_semantics<arbitrary>], iteration_bounds = array<i64: 1>, scalar_prefetch = 0 : i64, scratch_operands = 0 : i64, tpu.core_type = #tpu.core_type<tc>, window_params = [{pipeline_mode = #tpu.pipeline_mode<synchronous>, transform_indices = @transform_0, window_bounds = array<i64: 64, 112>}, {pipeline_mode = #tpu.pipeline_mode<synchronous>, transform_indices = @transform_1, window_bounds = array<i64: 112, 1024>}, {pipeline_mode = #tpu.pipeline_mode<synchronous>, transform_indices = @transform_2, window_bounds = array<i64: 64, 1>}, {pipeline_mode = #tpu.pipeline_mode<synchronous>, transform_indices = @transform_3, window_bounds = array<i64: 64, 1>}, {pipeline_mode = #tpu.pipeline_mode<synchronous>, transform_indices = @transform_4, window_bounds = array<i64: 64, 1024>}]} {
    %c0 = arith.constant 0 : index
    %c0_0 = arith.constant 0 : index
    %0 = vector.load %arg1[%c0, %c0_0] : memref<64x112xf32, #tpu.memory_space<vmem>>, vector<64x112xf32>
    %1 = arith.truncf %0 : vector<64x112xf32> to vector<64x112xbf16>
    %c0_1 = arith.constant 0 : index
    %c0_2 = arith.constant 0 : index
    %2 = vector.load %arg2[%c0_1, %c0_2] : memref<112x1024xf32, #tpu.memory_space<vmem>>, vector<112x1024xf32>
    %3 = arith.truncf %2 : vector<112x1024xf32> to vector<112x1024xbf16>
    %cst = arith.constant dense<0.000000e+00> : vector<64x1024xf32>
    %4 = tpu.matmul %1, %3, %cst {dimension_numbers = #tpu.dot_dimension_numbers<[1], [0], [0], [1], [0, 0, 1, 1], [], []>} : vector<64x112xbf16>, vector<112x1024xbf16>, vector<64x1024xf32> -> vector<64x1024xf32>
    %cst_3 = arith.constant dense<0.000000e+00> : vector<64xf32>
    %5 = vector.multi_reduction <add>, %4, %cst_3 [1] : vector<64x1024xf32> to vector<64xf32>
    %6 = vector.shape_cast %5 : vector<64xf32> to vector<64x1xf32>
    %7 = arith.mulf %4, %4 : vector<64x1024xf32>
    %cst_4 = arith.constant dense<0.000000e+00> : vector<64xf32>
    %8 = vector.multi_reduction <add>, %7, %cst_4 [1] : vector<64x1024xf32> to vector<64xf32>
    %9 = vector.shape_cast %8 : vector<64xf32> to vector<64x1xf32>
    %cst_5 = arith.constant 9.765625E-4 : f32
    %10 = vector.broadcast %cst_5 : f32 to vector<64x1xf32>
    %11 = arith.mulf %6, %10 : vector<64x1xf32>
    %cst_6 = arith.constant 9.765625E-4 : f32
    %12 = vector.broadcast %cst_6 : f32 to vector<64x1xf32>
    %13 = arith.mulf %9, %12 : vector<64x1xf32>
    %14 = arith.mulf %11, %11 : vector<64x1xf32>
    %15 = arith.subf %13, %14 : vector<64x1xf32>
    %c0_7 = arith.constant 0 : index
    %c0_8 = arith.constant 0 : index
    %16 = vector.load %arg3[%c0_7, %c0_8] : memref<64x1xf32, #tpu.memory_space<vmem>>, vector<64x1xf32>
    %cst_9 = arith.constant 9.99999974E-6 : f32
    %17 = vector.broadcast %cst_9 : f32 to vector<64x1xf32>
    %18 = arith.addf %15, %17 : vector<64x1xf32>
    %19 = math.rsqrt %18 : vector<64x1xf32>
    %20 = arith.mulf %16, %19 : vector<64x1xf32>
    %c0_10 = arith.constant 0 : index
    %c0_11 = arith.constant 0 : index
    %21 = vector.load %arg4[%c0_10, %c0_11] : memref<64x1xf32, #tpu.memory_space<vmem>>, vector<64x1xf32>
    %22 = arith.mulf %11, %20 : vector<64x1xf32>
    %23 = arith.subf %21, %22 : vector<64x1xf32>
    %24 = vector.broadcast %20 : vector<64x1xf32> to vector<64x1024xf32>
    %25 = arith.mulf %4, %24 : vector<64x1024xf32>
    %26 = vector.broadcast %23 : vector<64x1xf32> to vector<64x1024xf32>
    %27 = arith.addf %25, %26 : vector<64x1024xf32>
    %c0_12 = arith.constant 0 : index
    %c0_13 = arith.constant 0 : index
    %28 = vector.load %arg5[%c0_12, %c0_13] : memref<64x1024xf32, #tpu.memory_space<vmem>>, vector<64x1024xf32>
    tpu.vector_store %arg5[%c0_12, %c0_13], %27 {strides = array<i32>} : memref<64x1024xf32, #tpu.memory_space<vmem>>, vector<64x1024xf32>,
    return
  }
  func.func @transform_0(%arg0: i32) -> (i32, i32) {
    %c0_i32 = arith.constant 0 : i32
    %c0_i32_0 = arith.constant 0 : i32
    %c0_i32_1 = arith.constant 0 : i32
    return %c0_i32, %c0_i32_0 : i32, i32
  }
  func.func @transform_1(%arg0: i32) -> (i32, i32) {
    %c0_i32 = arith.constant 0 : i32
    %c0_i32_0 = arith.constant 0 : i32
    %c0_i32_1 = arith.constant 0 : i32
    return %c0_i32, %c0_i32_0 : i32, i32
  }
  func.func @transform_2(%arg0: i32) -> (i32, i32) {
    %c0_i32 = arith.constant 0 : i32
    %c0_i32_0 = arith.constant 0 : i32
    %c0_i32_1 = arith.constant 0 : i32
    return %c0_i32, %c0_i32_0 : i32, i32
  }
  func.func @transform_3(%arg0: i32) -> (i32, i32) {
    %c0_i32 = arith.constant 0 : i32
    %c0_i32_0 = arith.constant 0 : i32
    %c0_i32_1 = arith.constant 0 : i32
    return %c0_i32, %c0_i32_0 : i32, i32
  }
  func.func @transform_4(%arg0: i32) -> (i32, i32) {
    %c0_i32 = arith.constant 0 : i32
    %c0_i32_0 = arith.constant 0 : i32
    %c0_i32_1 = arith.constant 0 : i32
    return %c0_i32, %c0_i32_0 : i32, i32
  }
}

</mosaic_0001>

<llo_original>
// kernel: mapping_forward.1
$region0: #{mapping_forward.1}
  #allocation0 [shape = 'u32[]', space=smem, size = 0x4, offset = 0x4, fixed_abs, tag = 'smem constant byte address 0x4 - core index']
  #allocation1 [shape = 'u32[72,128]{1,0:T(1,128)}', space=vmem, size = 0x9000, scoped, tag = 'internal scratch']
  %s0 = inlined_call_operand.vmem [shape: f32[64,112], index: 0, kind: input, shape index: {}]
  %s1 = inlined_call_operand.vmem [shape: f32[112,1024], index: 1, kind: input, shape index: {}]
  %s2 = inlined_call_operand.vmem [shape: f32[64,1], index: 2, kind: input, shape index: {}]
  %s3 = inlined_call_operand.vmem [shape: f32[64,1], index: 3, kind: input, shape index: {}]
  %s4 = inlined_call_operand.vmem [shape: f32[64,1024], index: 4, kind: output, shape index: {}]
  %s5 = sld [smem:[#allocation0]]
  $region26: #{mapping_forward.1} parent=0
    _
  %s7 = ssub.s32 1, %s5
  %s8 = scalar_select 0, %s7, %s5
  // Predicated region
  $region2: #{mapping_forward.1} parent=0 // pred_check
    _
  $region3: #{mapping_forward.1} parent=0 // pred_check_branch
    %10 = sbr.rel (0) target = $region5
  $region4: #{mapping_forward.1} parent=0 // pred_region
    _
  $region5: #{mapping_forward.1} parent=0 // pred_fallthru
    _
  // Predicated region
  $region6: #{mapping_forward.1} parent=0 // pred_check
    _
  $region7: #{mapping_forward.1} parent=0 // pred_check_branch
    %12 = sbr.rel (0) target = $region9
  $region8: #{mapping_forward.1} parent=0 // pred_region
    _
  $region9: #{mapping_forward.1} parent=0 // pred_fallthru
    _
  // Predicated region
  $region10: #{mapping_forward.1} parent=0 // pred_check
    _
  $region11: #{mapping_forward.1} parent=0 // pred_check_branch
    %14 = sbr.rel (0) target = $region13
  $region12: #{mapping_forward.1} parent=0 // pred_region
    _
  $region13: #{mapping_forward.1} parent=0 // pred_fallthru
    _
  // Predicated region
  $region14: #{mapping_forward.1} parent=0 // pred_check
    _
  $region15: #{mapping_forward.1} parent=0 // pred_check_branch
    %16 = sbr.rel (0) target = $region17
  $region16: #{mapping_forward.1} parent=0 // pred_region
    _
  $region17: #{mapping_forward.1} parent=0 // pred_fallthru
    _
  %v18 = vld [vmem:[%s0] sm:$0xff]
  %v19 = vld [vmem:[%s0 + $0x8] sm:$0xff]
  %v20 = vld [vmem:[%s0 + $0x10] sm:$0xff]
  %v21 = vld [vmem:[%s0 + $0x18] sm:$0xff]
  %v22 = vld [vmem:[%s0 + $0x20] sm:$0xff]
  %v23 = vld [vmem:[%s0 + $0x28] sm:$0xff]
  %v24 = vld [vmem:[%s0 + $0x30] sm:$0xff]
  %v25 = vld [vmem:[%s0 + $0x38] sm:$0xff]
  %v26 = vpack.c.bf16 %v19, %v18
  %v27 = vpack.c.bf16 %v21, %v20
  %v28 = vpack.c.bf16 %v23, %v22
  %v29 = vpack.c.bf16 %v25, %v24
  %v30 = vld [vmem:[%s1] sm:$0xff]
  %v31 = vld [vmem:[%s1 + $0x8] sm:$0xff]
  %v32 = vld [vmem:[%s1 + $0x10] sm:$0xff]
  %v33 = vld [vmem:[%s1 + $0x18] sm:$0xff]
  %v34 = vld [vmem:[%s1 + $0x20] sm:$0xff]
  %v35 = vld [vmem:[%s1 + $0x28] sm:$0xff]
  %v36 = vld [vmem:[%s1 + $0x30] sm:$0xff]
  %v37 = vld [vmem:[%s1 + $0x38] sm:$0xff]
  %v38 = vld [vmem:[%s1 + $0x40] sm:$0xff]
  %v39 = vld [vmem:[%s1 + $0x48] sm:$0xff]
  %v40 = vld [vmem:[%s1 + $0x50] sm:$0xff]
  %v41 = vld [vmem:[%s1 + $0x58] sm:$0xff]
  %v42 = vld [vmem:[%s1 + $0x60] sm:$0xff]
  %v43 = vld [vmem:[%s1 + $0x68] sm:$0xff]
  %v44 = vld [vmem:[%s1 + $0x70] sm:$0xff]
  %v45 = vld [vmem:[%s1 + $0x78] sm:$0xff]
  %v46 = vld [vmem:[%s1 + $0x80] sm:$0xff]
  %v47 = vld [vmem:[%s1 + $0x88] sm:$0xff]
  %v48 = vld [vmem:[%s1 + $0x90] sm:$0xff]
  %v49 = vld [vmem:[%s1 + $0x98] sm:$0xff]
  %v50 = vld [vmem:[%s1 + $0xa0] sm:$0xff]
  %v51 = vld [vmem:[%s1 + $0xa8] sm:$0xff]
  %v52 = vld [vmem:[%s1 + $0xb0] sm:$0xff]
  %v53 = vld [vmem:[%s1 + $0xb8] sm:$0xff]
  %v54 = vld [vmem:[%s1 + $0xc0] sm:$0xff]
  %v55 = vld [vmem:[%s1 + $0xc8] sm:$0xff]
  %v56 = vld [vmem:[%s1 + $0xd0] sm:$0xff]
  %v57 = vld [vmem:[%s1 + $0xd8] sm:$0xff]
  %v58 = vld [vmem:[%s1 + $0xe0] sm:$0xff]
  %v59 = vld [vmem:[%s1 + $0xe8] sm:$0xff]
  %v60 = vld [vmem:[%s1 + $0xf0] sm:$0xff]
  %v61 = vld [vmem:[%s1 + $0xf8] sm:$0xff]
  %v62 = vld [vmem:[%s1 + $0x100] sm:$0xff]
  %v63 = vld [vmem:[%s1 + $0x108] sm:$0xff]
  %v64 = vld [vmem:[%s1 + $0x110] sm:$0xff]
  %v65 = vld [vmem:[%s1 + $0x118] sm:$0xff]
  %v66 = vld [vmem:[%s1 + $0x120] sm:$0xff]
  %v67 = vld [vmem:[%s1 + $0x128] sm:$0xff]
  %v68 = vld [vmem:[%s1 + $0x130] sm:$0xff]
  %v69 = vld [vmem:[%s1 + $0x138] sm:$0xff]
  %v70 = vld [vmem:[%s1 + $0x140] sm:$0xff]
  %v71 = vld [vmem:[%s1 + $0x148] sm:$0xff]
  %v72 = vld [vmem:[%s1 + $0x150] sm:$0xff]
  %v73 = vld [vmem:[%s1 + $0x158] sm:$0xff]
  %v74 = vld [vmem:[%s1 + $0x160] sm:$0xff]
  %v75 = vld [vmem:[%s1 + $0x168] sm:$0xff]
  %v76 = vld [vmem:[%s1 + $0x170] sm:$0xff]
  %v77 = vld [vmem:[%s1 + $0x178] sm:$0xff]
  %v78 = vld [vmem:[%s1 + $0x180] sm:$0xff]
  %v79 = vld [vmem:[%s1 + $0x188] sm:$0xff]
  %v80 = vld [vmem:[%s1 + $0x190] sm:$0xff]
  %v81 = vld [vmem:[%s1 + $0x198] sm:$0xff]
  %v82 = vld [vmem:[%s1 + $0x1a0] sm:$0xff]
  %v83 = vld [vmem:[%s1 + $0x1a8] sm:$0xff]
  %v84 = vld [vmem:[%s1 + $0x1b0] sm:$0xff]
  %v85 = vld [vmem:[%s1 + $0x1b8] sm:$0xff]
  %v86 = vld [vmem:[%s1 + $0x1c0] sm:$0xff]
  %v87 = vld [vmem:[%s1 + $0x1c8] sm:$0xff]
  %v88 = vld [vmem:[%s1 + $0x1d0] sm:$0xff]
  %v89 = vld [vmem:[%s1 + $0x1d8] sm:$0xff]
  %v90 = vld [vmem:[%s1 + $0x1e0] sm:$0xff]
  %v91 = vld [vmem:[%s1 + $0x1e8] sm:$0xff]
  %v92 = vld [vmem:[%s1 + $0x1f0] sm:$0xff]
  %v93 = vld [vmem:[%s1 + $0x1f8] sm:$0xff]
  %v94 = vld [vmem:[%s1 + $0x200] sm:$0xff]
  %v95 = vld [vmem:[%s1 + $0x208] sm:$0xff]
  %v96 = vld [vmem:[%s1 + $0x210] sm:$0xff]
  %v97 = vld [vmem:[%s1 + $0x218] sm:$0xff]
  %v98 = vld [vmem:[%s1 + $0x220] sm:$0xff]
  %v99 = vld [vmem:[%s1 + $0x228] sm:$0xff]
  %v100 = vld [vmem:[%s1 + $0x230] sm:$0xff]
  %v101 = vld [vmem:[%s1 + $0x238] sm:$0xff]
  %v102 = vld [vmem:[%s1 + $0x240] sm:$0xff]
  %v103 = vld [vmem:[%s1 + $0x248] sm:$0xff]
  %v104 = vld [vmem:[%s1 + $0x250] sm:$0xff]
  %v105 = vld [vmem:[%s1 + $0x258] sm:$0xff]
  %v106 = vld [vmem:[%s1 + $0x260] sm:$0xff]
  %v107 = vld [vmem:[%s1 + $0x268] sm:$0xff]
  %v108 = vld [vmem:[%s1 + $0x270] sm:$0xff]
  %v109 = vld [vmem:[%s1 + $0x278] sm:$0xff]
  %v110 = vld [vmem:[%s1 + $0x280] sm:$0xff]
  %v111 = vld [vmem:[%s1 + $0x288] sm:$0xff]
  %v112 = vld [vmem:[%s1 + $0x290] sm:$0xff]
  %v113 = vld [vmem:[%s1 + $0x298] sm:$0xff]
  %v114 = vld [vmem:[%s1 + $0x2a0] sm:$0xff]
  %v115 = vld [vmem:[%s1 + $0x2a8] sm:$0xff]
  %v116 = vld [vmem:[%s1 + $0x2b0] sm:$0xff]
  %v117 = vld [vmem:[%s1 + $0x2b8] sm:$0xff]
  %v118 = vld [vmem:[%s1 + $0x2c0] sm:$0xff]
  %v119 = vld [vmem:[%s1 + $0x2c8] sm:$0xff]
  %v120 = vld [vmem:[%s1 + $0x2d0] sm:$0xff]
  %v121 = vld [vmem:[%s1 + $0x2d8] sm:$0xff]
  %v122 = vld [vmem:[%s1 + $0x2e0] sm:$0xff]
  %v123 = vld [vmem:[%s1 + $0x2e8] sm:$0xff]
  %v124 = vld [vmem:[%s1 + $0x2f0] sm:$0xff]
  %v125 = vld [vmem:[%s1 + $0x2f8] sm:$0xff]
  %v126 = vld [vmem:[%s1 + $0x300] sm:$0xff]
  %v127 = vld [vmem:[%s1 + $0x308] sm:$0xff]
  %v128 = vld [vmem:[%s1 + $0x310] sm:$0xff]
  %v129 = vld [vmem:[%s1 + $0x318] sm:$0xff]
  %v130 = vld [vmem:[%s1 + $0x320] sm:$0xff]
  %v131 = vld [vmem:[%s1 + $0x328] sm:$0xff]
  %v132 = vld [vmem:[%s1 + $0x330] sm:$0xff]
  %v133 = vld [vmem:[%s1 + $0x338] sm:$0xff]
  %v134 = vld [vmem:[%s1 + $0x340] sm:$0xff]
  %v135 = vld [vmem:[%s1 + $0x348] sm:$0xff]
  %v136 = vld [vmem:[%s1 + $0x350] sm:$0xff]
  %v137 = vld [vmem:[%s1 + $0x358] sm:$0xff]
  %v138 = vld [vmem:[%s1 + $0x360] sm:$0xff]
  %v139 = vld [vmem:[%s1 + $0x368] sm:$0xff]
  %v140 = vld [vmem:[%s1 + $0x370] sm:$0xff]
  %v141 = vld [vmem:[%s1 + $0x378] sm:$0xff]
  %v142 = vpack.c.bf16 %v38, %v30
  %v143 = vpack.c.bf16 %v39, %v31
  %v144 = vpack.c.bf16 %v40, %v32
  %v145 = vpack.c.bf16 %v41, %v33
  %v146 = vpack.c.bf16 %v42, %v34
  %v147 = vpack.c.bf16 %v43, %v35
  %v148 = vpack.c.bf16 %v44, %v36
  %v149 = vpack.c.bf16 %v45, %v37
  %v150 = vpack.c.bf16 %v54, %v46
  %v151 = vpack.c.bf16 %v55, %v47
  %v152 = vpack.c.bf16 %v56, %v48
  %v153 = vpack.c.bf16 %v57, %v49
  %v154 = vpack.c.bf16 %v58, %v50
  %v155 = vpack.c.bf16 %v59, %v51
  %v156 = vpack.c.bf16 %v60, %v52
  %v157 = vpack.c.bf16 %v61, %v53
  %v158 = vpack.c.bf16 %v70, %v62
  %v159 = vpack.c.bf16 %v71, %v63
  %v160 = vpack.c.bf16 %v72, %v64
  %v161 = vpack.c.bf16 %v73, %v65
  %v162 = vpack.c.bf16 %v74, %v66
  %v163 = vpack.c.bf16 %v75, %v67
  %v164 = vpack.c.bf16 %v76, %v68
  %v165 = vpack.c.bf16 %v77, %v69
  %v166 = vpack.c.bf16 %v86, %v78
  %v167 = vpack.c.bf16 %v87, %v79
  %v168 = vpack.c.bf16 %v88, %v80
  %v169 = vpack.c.bf16 %v89, %v81
  %v170 = vpack.c.bf16 %v90, %v82
  %v171 = vpack.c.bf16 %v91, %v83
  %v172 = vpack.c.bf16 %v92, %v84
  %v173 = vpack.c.bf16 %v93, %v85
  %v174 = vpack.c.bf16 %v102, %v94
  %v175 = vpack.c.bf16 %v103, %v95
  %v176 = vpack.c.bf16 %v104, %v96
  %v177 = vpack.c.bf16 %v105, %v97
  %v178 = vpack.c.bf16 %v106, %v98
  %v179 = vpack.c.bf16 %v107, %v99
  %v180 = vpack.c.bf16 %v108, %v100
  %v181 = vpack.c.bf16 %v109, %v101
  %v182 = vpack.c.bf16 %v118, %v110
  %v183 = vpack.c.bf16 %v119, %v111
  %v184 = vpack.c.bf16 %v120, %v112
  %v185 = vpack.c.bf16 %v121, %v113
  %v186 = vpack.c.bf16 %v122, %v114
  %v187 = vpack.c.bf16 %v123, %v115
  %v188 = vpack.c.bf16 %v124, %v116
  %v189 = vpack.c.bf16 %v125, %v117
  %v190 = vpack.c.bf16 %v134, %v126
  %v191 = vpack.c.bf16 %v135, %v127
  %v192 = vpack.c.bf16 %v136, %v128
  %v193 = vpack.c.bf16 %v137, %v129
  %v194 = vpack.c.bf16 %v138, %v130
  %v195 = vpack.c.bf16 %v139, %v131
  %v196 = vpack.c.bf16 %v140, %v132
  %v197 = vpack.c.bf16 %v141, %v133
  %vm198 = vcmask 916480
  %v200 = vsel %vm198, %v26, 0
  %v203 = vsel %vm198, %v27, 0
  %v206 = vsel %vm198, %v28, 0
  %v209 = vsel %vm198, %v29, 0
  %211 = vmatpush.bf16.msra.mxu0 0
  %212 = vmatpush.bf16.msra.mxu0 %v190
  %213 = vmatpush.bf16.msra.mxu0 %v182
  %214 = vmatpush.bf16.msra.mxu0 %v174
  %215 = vmatpush.bf16.msra.mxu0 %v166
  %216 = vmatpush.bf16.msra.mxu0 %v158
  %217 = vmatpush.bf16.msra.mxu0 %v150
  %218 = vmatpush.bf16.msra.mxu0 %v142
  %219 = vmatmul.bf16.gmra.mxu0 %v200
  %v220 = vpop.f32.mrf.mxu0
  %v221 = vadd.f32 0.0, %v220
  %v222 = vpop.f32.mrf.mxu0
  %v223 = vadd.f32 0.0, %v222
  %224 = vmatmul.bf16.gmra.mxu0 %v203
  %v225 = vpop.f32.mrf.mxu0
  %v226 = vadd.f32 0.0, %v225
  %v227 = vpop.f32.mrf.mxu0
  %v228 = vadd.f32 0.0, %v227
  %229 = vmatmul.bf16.gmra.mxu0 %v206
  %v230 = vpop.f32.mrf.mxu0
  %v231 = vadd.f32 0.0, %v230
  %v232 = vpop.f32.mrf.mxu0
  %v233 = vadd.f32 0.0, %v232
  %234 = vmatmul.bf16.gmra.mxu0 %v209
  %v235 = vpop.f32.mrf.mxu0
  %v236 = vadd.f32 0.0, %v235
  %v237 = vpop.f32.mrf.mxu0
  %v238 = vadd.f32 0.0, %v237
  %239 = vdwg.mxu0
  %240 = vmatpush.bf16.msra.mxu0 0
  %241 = vmatpush.bf16.msra.mxu0 %v191
  %242 = vmatpush.bf16.msra.mxu0 %v183
  %243 = vmatpush.bf16.msra.mxu0 %v175
  %244 = vmatpush.bf16.msra.mxu0 %v167
  %245 = vmatpush.bf16.msra.mxu0 %v159
  %246 = vmatpush.bf16.msra.mxu0 %v151
  %247 = vmatpush.bf16.msra.mxu0 %v143
  %248 = vmatmul.bf16.gmra.mxu0 %v200
  %v249 = vpop.f32.mrf.mxu0
  %v250 = vadd.f32 0.0, %v249
  %v251 = vpop.f32.mrf.mxu0
  %v252 = vadd.f32 0.0, %v251
  %253 = vmatmul.bf16.gmra.mxu0 %v203
  %v254 = vpop.f32.mrf.mxu0
  %v255 = vadd.f32 0.0, %v254
  %v256 = vpop.f32.mrf.mxu0
  %v257 = vadd.f32 0.0, %v256
  %258 = vmatmul.bf16.gmra.mxu0 %v206
  %v259 = vpop.f32.mrf.mxu0
  %v260 = vadd.f32 0.0, %v259
  %v261 = vpop.f32.mrf.mxu0
  %v262 = vadd.f32 0.0, %v261
  %263 = vmatmul.bf16.gmra.mxu0 %v209
  %v264 = vpop.f32.mrf.mxu0
  %v265 = vadd.f32 0.0, %v264
  %v266 = vpop.f32.mrf.mxu0
  %v267 = vadd.f32 0.0, %v266
  %268 = vdwg.mxu0
  %269 = vmatpush.bf16.msra.mxu0 0
  %270 = vmatpush.bf16.msra.mxu0 %v192
  %271 = vmatpush.bf16.msra.mxu0 %v184
  %272 = vmatpush.bf16.msra.mxu0 %v176
  %273 = vmatpush.bf16.msra.mxu0 %v168
  %274 = vmatpush.bf16.msra.mxu0 %v160
  %275 = vmatpush.bf16.msra.mxu0 %v152
  %276 = vmatpush.bf16.msra.mxu0 %v144
  %277 = vmatmul.bf16.gmra.mxu0 %v200
  %v278 = vpop.f32.mrf.mxu0
  %v279 = vadd.f32 0.0, %v278
  %v280 = vpop.f32.mrf.mxu0
  %v281 = vadd.f32 0.0, %v280
  %282 = vmatmul.bf16.gmra.mxu0 %v203
  %v283 = vpop.f32.mrf.mxu0
  %v284 = vadd.f32 0.0, %v283
  %v285 = vpop.f32.mrf.mxu0
  %v286 = vadd.f32 0.0, %v285
  %287 = vmatmul.bf16.gmra.mxu0 %v206
  %v288 = vpop.f32.mrf.mxu0
  %v289 = vadd.f32 0.0, %v288
  %v290 = vpop.f32.mrf.mxu0
  %v291 = vadd.f32 0.0, %v290
  %292 = vmatmul.bf16.gmra.mxu0 %v209
  %v293 = vpop.f32.mrf.mxu0
  %v294 = vadd.f32 0.0, %v293
  %v295 = vpop.f32.mrf.mxu0
  %v296 = vadd.f32 0.0, %v295
  %297 = vdwg.mxu0
  %298 = vmatpush.bf16.msra.mxu0 0
  %299 = vmatpush.bf16.msra.mxu0 %v193
  %300 = vmatpush.bf16.msra.mxu0 %v185
  %301 = vmatpush.bf16.msra.mxu0 %v177
  %302 = vmatpush.bf16.msra.mxu0 %v169
  %303 = vmatpush.bf16.msra.mxu0 %v161
  %304 = vmatpush.bf16.msra.mxu0 %v153
  %305 = vmatpush.bf16.msra.mxu0 %v145
  %306 = vmatmul.bf16.gmra.mxu0 %v200
  %v307 = vpop.f32.mrf.mxu0
  %v308 = vadd.f32 0.0, %v307
  %v309 = vpop.f32.mrf.mxu0
  %v310 = vadd.f32 0.0, %v309
  %311 = vmatmul.bf16.gmra.mxu0 %v203
  %v312 = vpop.f32.mrf.mxu0
  %v313 = vadd.f32 0.0, %v312
  %v314 = vpop.f32.mrf.mxu0
  %v315 = vadd.f32 0.0, %v314
  %316 = vmatmul.bf16.gmra.mxu0 %v206
  %v317 = vpop.f32.mrf.mxu0
  %v318 = vadd.f32 0.0, %v317
  %v319 = vpop.f32.mrf.mxu0
  %v320 = vadd.f32 0.0, %v319
  %321 = vmatmul.bf16.gmra.mxu0 %v209
  %v322 = vpop.f32.mrf.mxu0
  %v323 = vadd.f32 0.0, %v322
  %v324 = vpop.f32.mrf.mxu0
  %v325 = vadd.f32 0.0, %v324
  %326 = vdwg.mxu0
  %327 = vmatpush.bf16.msra.mxu0 0
  %328 = vmatpush.bf16.msra.mxu0 %v194
  %329 = vmatpush.bf16.msra.mxu0 %v186
  %330 = vmatpush.bf16.msra.mxu0 %v178
  %331 = vmatpush.bf16.msra.mxu0 %v170
  %332 = vmatpush.bf16.msra.mxu0 %v162
  %333 = vmatpush.bf16.msra.mxu0 %v154
  %334 = vmatpush.bf16.msra.mxu0 %v146
  %335 = vmatmul.bf16.gmra.mxu0 %v200
  %v336 = vpop.f32.mrf.mxu0
  %v337 = vadd.f32 0.0, %v336
  %v338 = vpop.f32.mrf.mxu0
  %v339 = vadd.f32 0.0, %v338
  %340 = vmatmul.bf16.gmra.mxu0 %v203
  %v341 = vpop.f32.mrf.mxu0
  %v342 = vadd.f32 0.0, %v341
  %v343 = vpop.f32.mrf.mxu0
  %v344 = vadd.f32 0.0, %v343
  %345 = vmatmul.bf16.gmra.mxu0 %v206
  %v346 = vpop.f32.mrf.mxu0
  %v347 = vadd.f32 0.0, %v346
  %v348 = vpop.f32.mrf.mxu0
  %v349 = vadd.f32 0.0, %v348
  %350 = vmatmul.bf16.gmra.mxu0 %v209
  %v351 = vpop.f32.mrf.mxu0
  %v352 = vadd.f32 0.0, %v351
  %v353 = vpop.f32.mrf.mxu0
  %v354 = vadd.f32 0.0, %v353
  %355 = vdwg.mxu0
  %356 = vmatpush.bf16.msra.mxu0 0
  %357 = vmatpush.bf16.msra.mxu0 %v195
  %358 = vmatpush.bf16.msra.mxu0 %v187
  %359 = vmatpush.bf16.msra.mxu0 %v179
  %360 = vmatpush.bf16.msra.mxu0 %v171
  %361 = vmatpush.bf16.msra.mxu0 %v163
  %362 = vmatpush.bf16.msra.mxu0 %v155
  %363 = vmatpush.bf16.msra.mxu0 %v147
  %364 = vmatmul.bf16.gmra.mxu0 %v200
  %v365 = vpop.f32.mrf.mxu0
  %v366 = vadd.f32 0.0, %v365
  %v367 = vpop.f32.mrf.mxu0
  %v368 = vadd.f32 0.0, %v367
  %369 = vmatmul.bf16.gmra.mxu0 %v203
  %v370 = vpop.f32.mrf.mxu0
  %v371 = vadd.f32 0.0, %v370
  %v372 = vpop.f32.mrf.mxu0
  %v373 = vadd.f32 0.0, %v372
  %374 = vmatmul.bf16.gmra.mxu0 %v206
  %v375 = vpop.f32.mrf.mxu0
  %v376 = vadd.f32 0.0, %v375
  %v377 = vpop.f32.mrf.mxu0
  %v378 = vadd.f32 0.0, %v377
  %379 = vmatmul.bf16.gmra.mxu0 %v209
  %v380 = vpop.f32.mrf.mxu0
  %v381 = vadd.f32 0.0, %v380
  %v382 = vpop.f32.mrf.mxu0
  %v383 = vadd.f32 0.0, %v382
  %384 = vdwg.mxu0
  %385 = vmatpush.bf16.msra.mxu0 0
  %386 = vmatpush.bf16.msra.mxu0 %v196
  %387 = vmatpush.bf16.msra.mxu0 %v188
  %388 = vmatpush.bf16.msra.mxu0 %v180
  %389 = vmatpush.bf16.msra.mxu0 %v172
  %390 = vmatpush.bf16.msra.mxu0 %v164
  %391 = vmatpush.bf16.msra.mxu0 %v156
  %392 = vmatpush.bf16.msra.mxu0 %v148
  %393 = vmatmul.bf16.gmra.mxu0 %v200
  %v394 = vpop.f32.mrf.mxu0
  %v395 = vadd.f32 0.0, %v394
  %v396 = vpop.f32.mrf.mxu0
  %v397 = vadd.f32 0.0, %v396
  %398 = vmatmul.bf16.gmra.mxu0 %v203
  %v399 = vpop.f32.mrf.mxu0
  %v400 = vadd.f32 0.0, %v399
  %v401 = vpop.f32.mrf.mxu0
  %v402 = vadd.f32 0.0, %v401
  %403 = vmatmul.bf16.gmra.mxu0 %v206
  %v404 = vpop.f32.mrf.mxu0
  %v405 = vadd.f32 0.0, %v404
  %v406 = vpop.f32.mrf.mxu0
  %v407 = vadd.f32 0.0, %v406
  %408 = vmatmul.bf16.gmra.mxu0 %v209
  %v409 = vpop.f32.mrf.mxu0
  %v410 = vadd.f32 0.0, %v409
  %v411 = vpop.f32.mrf.mxu0
  %v412 = vadd.f32 0.0, %v411
  %413 = vdwg.mxu0
  %414 = vmatpush.bf16.msra.mxu0 0
  %415 = vmatpush.bf16.msra.mxu0 %v197
  %416 = vmatpush.bf16.msra.mxu0 %v189
  %417 = vmatpush.bf16.msra.mxu0 %v181
  %418 = vmatpush.bf16.msra.mxu0 %v173
  %419 = vmatpush.bf16.msra.mxu0 %v165
  %420 = vmatpush.bf16.msra.mxu0 %v157
  %421 = vmatpush.bf16.msra.mxu0 %v149
  %422 = vmatmul.bf16.gmra.mxu0 %v200
  %v423 = vpop.f32.mrf.mxu0
  %v424 = vadd.f32 0.0, %v423
  %v425 = vpop.f32.mrf.mxu0
  %v426 = vadd.f32 0.0, %v425
  %427 = vmatmul.bf16.gmra.mxu0 %v203
  %v428 = vpop.f32.mrf.mxu0
  %v429 = vadd.f32 0.0, %v428
  %v430 = vpop.f32.mrf.mxu0
  %v431 = vadd.f32 0.0, %v430
  %432 = vmatmul.bf16.gmra.mxu0 %v206
  %v433 = vpop.f32.mrf.mxu0
  %v434 = vadd.f32 0.0, %v433
  %v435 = vpop.f32.mrf.mxu0
  %v436 = vadd.f32 0.0, %v435
  %437 = vmatmul.bf16.gmra.mxu0 %v209
  %v438 = vpop.f32.mrf.mxu0
  %v439 = vadd.f32 0.0, %v438
  %v440 = vpop.f32.mrf.mxu0
  %v441 = vadd.f32 0.0, %v440
  %442 = vdwg.mxu0
  %v443 = vadd.f32 %v221, %v250
  %v444 = vadd.f32 %v443, %v279
  %v445 = vadd.f32 %v444, %v308
  %v446 = vadd.f32 %v445, %v337
  %v447 = vadd.f32 %v446, %v366
  %v448 = vadd.f32 %v447, %v395
  %v449 = vadd.f32 %v448, %v424
  %450 = vadd.xlane.f32.xlu0 %v449
  %v451 = vpop.xlane.xlu0 %450
  %v452 = vadd.f32 %v223, %v252
  %v453 = vadd.f32 %v452, %v281
  %v454 = vadd.f32 %v453, %v310
  %v455 = vadd.f32 %v454, %v339
  %v456 = vadd.f32 %v455, %v368
  %v457 = vadd.f32 %v456, %v397
  %v458 = vadd.f32 %v457, %v426
  %459 = vadd.xlane.f32.xlu0 %v458
  %v460 = vpop.xlane.xlu0 %459
  %v461 = vadd.f32 %v226, %v255
  %v462 = vadd.f32 %v461, %v284
  %v463 = vadd.f32 %v462, %v313
  %v464 = vadd.f32 %v463, %v342
  %v465 = vadd.f32 %v464, %v371
  %v466 = vadd.f32 %v465, %v400
  %v467 = vadd.f32 %v466, %v429
  %468 = vadd.xlane.f32.xlu0 %v467
  %v469 = vpop.xlane.xlu0 %468
  %v470 = vadd.f32 %v228, %v257
  %v471 = vadd.f32 %v470, %v286
  %v472 = vadd.f32 %v471, %v315
  %v473 = vadd.f32 %v472, %v344
  %v474 = vadd.f32 %v473, %v373
  %v475 = vadd.f32 %v474, %v402
  %v476 = vadd.f32 %v475, %v431
  %477 = vadd.xlane.f32.xlu0 %v476
  %v478 = vpop.xlane.xlu0 %477
  %v479 = vadd.f32 %v231, %v260
  %v480 = vadd.f32 %v479, %v289
  %v481 = vadd.f32 %v480, %v318
  %v482 = vadd.f32 %v481, %v347
  %v483 = vadd.f32 %v482, %v376
  %v484 = vadd.f32 %v483, %v405
  %v485 = vadd.f32 %v484, %v434
  %486 = vadd.xlane.f32.xlu0 %v485
  %v487 = vpop.xlane.xlu0 %486
  %v488 = vadd.f32 %v233, %v262
  %v489 = vadd.f32 %v488, %v291
  %v490 = vadd.f32 %v489, %v320
  %v491 = vadd.f32 %v490, %v349
  %v492 = vadd.f32 %v491, %v378
  %v493 = vadd.f32 %v492, %v407
  %v494 = vadd.f32 %v493, %v436
  %495 = vadd.xlane.f32.xlu0 %v494
  %v496 = vpop.xlane.xlu0 %495
  %v497 = vadd.f32 %v236, %v265
  %v498 = vadd.f32 %v497, %v294
  %v499 = vadd.f32 %v498, %v323
  %v500 = vadd.f32 %v499, %v352
  %v501 = vadd.f32 %v500, %v381
  %v502 = vadd.f32 %v501, %v410
  %v503 = vadd.f32 %v502, %v439
  %504 = vadd.xlane.f32.xlu0 %v503
  %v505 = vpop.xlane.xlu0 %504
  %v506 = vadd.f32 %v238, %v267
  %v507 = vadd.f32 %v506, %v296
  %v508 = vadd.f32 %v507, %v325
  %v509 = vadd.f32 %v508, %v354
  %v510 = vadd.f32 %v509, %v383
  %v511 = vadd.f32 %v510, %v412
  %v512 = vadd.f32 %v511, %v441
  %513 = vadd.xlane.f32.xlu0 %v512
  %v514 = vpop.xlane.xlu0 %513
  %v515 = vmul.f32 %v221, %v221
  %v516 = vmul.f32 %v250, %v250
  %v517 = vmul.f32 %v279, %v279
  %v518 = vmul.f32 %v308, %v308
  %v519 = vmul.f32 %v337, %v337
  %v520 = vmul.f32 %v366, %v366
  %v521 = vmul.f32 %v395, %v395
  %v522 = vmul.f32 %v424, %v424
  %v523 = vmul.f32 %v223, %v223
  %v524 = vmul.f32 %v252, %v252
  %v525 = vmul.f32 %v281, %v281
  %v526 = vmul.f32 %v310, %v310
  %v527 = vmul.f32 %v339, %v339
  %v528 = vmul.f32 %v368, %v368
  %v529 = vmul.f32 %v397, %v397
  %v530 = vmul.f32 %v426, %v426
  %v531 = vmul.f32 %v226, %v226
  %v532 = vmul.f32 %v255, %v255
  %v533 = vmul.f32 %v284, %v284
  %v534 = vmul.f32 %v313, %v313
  %v535 = vmul.f32 %v342, %v342
  %v536 = vmul.f32 %v371, %v371
  %v537 = vmul.f32 %v400, %v400
  %v538 = vmul.f32 %v429, %v429
  %v539 = vmul.f32 %v228, %v228
  %v540 = vmul.f32 %v257, %v257
  %v541 = vmul.f32 %v286, %v286
  %v542 = vmul.f32 %v315, %v315
  %v543 = vmul.f32 %v344, %v344
  %v544 = vmul.f32 %v373, %v373
  %v545 = vmul.f32 %v402, %v402
  %v546 = vmul.f32 %v431, %v431
  %v547 = vmul.f32 %v231, %v231
  %v548 = vmul.f32 %v260, %v260
  %v549 = vmul.f32 %v289, %v289
  %v550 = vmul.f32 %v318, %v318
  %v551 = vmul.f32 %v347, %v347
  %v552 = vmul.f32 %v376, %v376
  %v553 = vmul.f32 %v405, %v405
  %v554 = vmul.f32 %v434, %v434
  %v555 = vmul.f32 %v233, %v233
  %v556 = vmul.f32 %v262, %v262
  %v557 = vmul.f32 %v291, %v291
  %v558 = vmul.f32 %v320, %v320
  %v559 = vmul.f32 %v349, %v349
  %v560 = vmul.f32 %v378, %v378
  %v561 = vmul.f32 %v407, %v407
  %v562 = vmul.f32 %v436, %v436
  %v563 = vmul.f32 %v236, %v236
  %v564 = vmul.f32 %v265, %v265
  %v565 = vmul.f32 %v294, %v294
  %v566 = vmul.f32 %v323, %v323
  %v567 = vmul.f32 %v352, %v352
  %v568 = vmul.f32 %v381, %v381
  %v569 = vmul.f32 %v410, %v410
  %v570 = vmul.f32 %v439, %v439
  %v571 = vmul.f32 %v238, %v238
  %v572 = vmul.f32 %v267, %v267
  %v573 = vmul.f32 %v296, %v296
  %v574 = vmul.f32 %v325, %v325
  %v575 = vmul.f32 %v354, %v354
  %v576 = vmul.f32 %v383, %v383
  %v577 = vmul.f32 %v412, %v412
  %v578 = vmul.f32 %v441, %v441
  %v579 = vadd.f32 %v515, %v516
  %v580 = vadd.f32 %v579, %v517
  %v581 = vadd.f32 %v580, %v518
  %v582 = vadd.f32 %v581, %v519
  %v583 = vadd.f32 %v582, %v520
  %v584 = vadd.f32 %v583, %v521
  %v585 = vadd.f32 %v584, %v522
  %586 = vadd.xlane.f32.xlu0 %v585
  %v587 = vpop.xlane.xlu0 %586
  %v588 = vadd.f32 %v523, %v524
  %v589 = vadd.f32 %v588, %v525
  %v590 = vadd.f32 %v589, %v526
  %v591 = vadd.f32 %v590, %v527
  %v592 = vadd.f32 %v591, %v528
  %v593 = vadd.f32 %v592, %v529
  %v594 = vadd.f32 %v593, %v530
  %595 = vadd.xlane.f32.xlu0 %v594
  %v596 = vpop.xlane.xlu0 %595
  %v597 = vadd.f32 %v531, %v532
  %v598 = vadd.f32 %v597, %v533
  %v599 = vadd.f32 %v598, %v534
  %v600 = vadd.f32 %v599, %v535
  %v601 = vadd.f32 %v600, %v536
  %v602 = vadd.f32 %v601, %v537
  %v603 = vadd.f32 %v602, %v538
  %604 = vadd.xlane.f32.xlu0 %v603
  %v605 = vpop.xlane.xlu0 %604
  %v606 = vadd.f32 %v539, %v540
  %v607 = vadd.f32 %v606, %v541
  %v608 = vadd.f32 %v607, %v542
  %v609 = vadd.f32 %v608, %v543
  %v610 = vadd.f32 %v609, %v544
  %v611 = vadd.f32 %v610, %v545
  %v612 = vadd.f32 %v611, %v546
  %613 = vadd.xlane.f32.xlu0 %v612
  %v614 = vpop.xlane.xlu0 %613
  %v615 = vadd.f32 %v547, %v548
  %v616 = vadd.f32 %v615, %v549
  %v617 = vadd.f32 %v616, %v550
  %v618 = vadd.f32 %v617, %v551
  %v619 = vadd.f32 %v618, %v552
  %v620 = vadd.f32 %v619, %v553
  %v621 = vadd.f32 %v620, %v554
  %622 = vadd.xlane.f32.xlu0 %v621
  %v623 = vpop.xlane.xlu0 %622
  %v624 = vadd.f32 %v555, %v556
  %v625 = vadd.f32 %v624, %v557
  %v626 = vadd.f32 %v625, %v558
  %v627 = vadd.f32 %v626, %v559
  %v628 = vadd.f32 %v627, %v560
  %v629 = vadd.f32 %v628, %v561
  %v630 = vadd.f32 %v629, %v562
  %631 = vadd.xlane.f32.xlu0 %v630
  %v632 = vpop.xlane.xlu0 %631
  %v633 = vadd.f32 %v563, %v564
  %v634 = vadd.f32 %v633, %v565
  %v635 = vadd.f32 %v634, %v566
  %v636 = vadd.f32 %v635, %v567
  %v637 = vadd.f32 %v636, %v568
  %v638 = vadd.f32 %v637, %v569
  %v639 = vadd.f32 %v638, %v570
  %640 = vadd.xlane.f32.xlu0 %v639
  %v641 = vpop.xlane.xlu0 %640
  %v642 = vadd.f32 %v571, %v572
  %v643 = vadd.f32 %v642, %v573
  %v644 = vadd.f32 %v643, %v574
  %v645 = vadd.f32 %v644, %v575
  %v646 = vadd.f32 %v645, %v576
  %v647 = vadd.f32 %v646, %v577
  %v648 = vadd.f32 %v647, %v578
  %649 = vadd.xlane.f32.xlu0 %v648
  %v650 = vpop.xlane.xlu0 %649
  %v651 = vmul.f32 %v451, 0.0009765625
  %v652 = vmul.f32 %v460, 0.0009765625
  %v653 = vmul.f32 %v469, 0.0009765625
  %v654 = vmul.f32 %v478, 0.0009765625
  %v655 = vmul.f32 %v487, 0.0009765625
  %v656 = vmul.f32 %v496, 0.0009765625
  %v657 = vmul.f32 %v505, 0.0009765625
  %v658 = vmul.f32 %v514, 0.0009765625
  %v659 = vmul.f32 %v587, 0.0009765625
  %v660 = vmul.f32 %v596, 0.0009765625
  %v661 = vmul.f32 %v605, 0.0009765625
  %v662 = vmul.f32 %v614, 0.0009765625
  %v663 = vmul.f32 %v623, 0.0009765625
  %v664 = vmul.f32 %v632, 0.0009765625
  %v665 = vmul.f32 %v641, 0.0009765625
  %v666 = vmul.f32 %v650, 0.0009765625
  %v667 = vmul.f32 %v651, %v651
  %v668 = vmul.f32 %v652, %v652
  %v669 = vmul.f32 %v653, %v653
  %v670 = vmul.f32 %v654, %v654
  %v671 = vmul.f32 %v655, %v655
  %v672 = vmul.f32 %v656, %v656
  %v673 = vmul.f32 %v657, %v657
  %v674 = vmul.f32 %v658, %v658
  %v675 = vsub.f32 %v659, %v667
  %v676 = vsub.f32 %v660, %v668
  %v677 = vsub.f32 %v661, %v669
  %v678 = vsub.f32 %v662, %v670
  %v679 = vsub.f32 %v663, %v671
  %v680 = vsub.f32 %v664, %v672
  %v681 = vsub.f32 %v665, %v673
  %v682 = vsub.f32 %v666, %v674
  %v683 = vld [vmem:[%s2] sm:$0xff]
  %v684 = vld [vmem:[%s2 + $0x8] sm:$0xff]
  %v685 = vld [vmem:[%s2 + $0x10] sm:$0xff]
  %v686 = vld [vmem:[%s2 + $0x18] sm:$0xff]
  %v687 = vld [vmem:[%s2 + $0x20] sm:$0xff]
  %v688 = vld [vmem:[%s2 + $0x28] sm:$0xff]
  %v689 = vld [vmem:[%s2 + $0x30] sm:$0xff]
  %v690 = vld [vmem:[%s2 + $0x38] sm:$0xff]
  %v691 = vadd.f32 %v675, 1e-05
  %v692 = vadd.f32 %v676, 1e-05
  %v693 = vadd.f32 %v677, 1e-05
  %v694 = vadd.f32 %v678, 1e-05
  %v695 = vadd.f32 %v679, 1e-05
  %v696 = vadd.f32 %v680, 1e-05
  %v697 = vadd.f32 %v681, 1e-05
  %v698 = vadd.f32 %v682, 1e-05
  %v699 = vrsqrt.pop %v691
  %v700 = vmul.f32 %v699, %v691
  %v701 = vmul.f32 %v700, %v699
  %v702 = vmul.f32 0.5, %v701
  %v703 = vsub.f32 1.5, %v702
  %v704 = vmul.f32 %v699, %v703
  %vm705 = vweird.f32 %v691
  %vm706 = vweird.f32 %v699
  %vm707 = vmor %vm705, %vm706
  %v708 = vsel %vm707, %v699, %v704
  %v709 = vrsqrt.pop %v692
  %v710 = vmul.f32 %v709, %v692
  %v711 = vmul.f32 %v710, %v709
  %v712 = vmul.f32 0.5, %v711
  %v713 = vsub.f32 1.5, %v712
  %v714 = vmul.f32 %v709, %v713
  %vm715 = vweird.f32 %v692
  %vm716 = vweird.f32 %v709
  %vm717 = vmor %vm715, %vm716
  %v718 = vsel %vm717, %v709, %v714
  %v719 = vrsqrt.pop %v693
  %v720 = vmul.f32 %v719, %v693
  %v721 = vmul.f32 %v720, %v719
  %v722 = vmul.f32 0.5, %v721
  %v723 = vsub.f32 1.5, %v722
  %v724 = vmul.f32 %v719, %v723
  %vm725 = vweird.f32 %v693
  %vm726 = vweird.f32 %v719
  %vm727 = vmor %vm725, %vm726
  %v728 = vsel %vm727, %v719, %v724
  %v729 = vrsqrt.pop %v694
  %v730 = vmul.f32 %v729, %v694
  %v731 = vmul.f32 %v730, %v729
  %v732 = vmul.f32 0.5, %v731
  %v733 = vsub.f32 1.5, %v732
  %v734 = vmul.f32 %v729, %v733
  %vm735 = vweird.f32 %v694
  %vm736 = vweird.f32 %v729
  %vm737 = vmor %vm735, %vm736
  %v738 = vsel %vm737, %v729, %v734
  %v739 = vrsqrt.pop %v695
  %v740 = vmul.f32 %v739, %v695
  %v741 = vmul.f32 %v740, %v739
  %v742 = vmul.f32 0.5, %v741
  %v743 = vsub.f32 1.5, %v742
  %v744 = vmul.f32 %v739, %v743
  %vm745 = vweird.f32 %v695
  %vm746 = vweird.f32 %v739
  %vm747 = vmor %vm745, %vm746
  %v748 = vsel %vm747, %v739, %v744
  %v749 = vrsqrt.pop %v696
  %v750 = vmul.f32 %v749, %v696
  %v751 = vmul.f32 %v750, %v749
  %v752 = vmul.f32 0.5, %v751
  %v753 = vsub.f32 1.5, %v752
  %v754 = vmul.f32 %v749, %v753
  %vm755 = vweird.f32 %v696
  %vm756 = vweird.f32 %v749
  %vm757 = vmor %vm755, %vm756
  %v758 = vsel %vm757, %v749, %v754
  %v759 = vrsqrt.pop %v697
  %v760 = vmul.f32 %v759, %v697
  %v761 = vmul.f32 %v760, %v759
  %v762 = vmul.f32 0.5, %v761
  %v763 = vsub.f32 1.5, %v762
  %v764 = vmul.f32 %v759, %v763
  %vm765 = vweird.f32 %v697
  %vm766 = vweird.f32 %v759
  %vm767 = vmor %vm765, %vm766
  %v768 = vsel %vm767, %v759, %v764
  %v769 = vrsqrt.pop %v698
  %v770 = vmul.f32 %v769, %v698
  %v771 = vmul.f32 %v770, %v769
  %v772 = vmul.f32 0.5, %v771
  %v773 = vsub.f32 1.5, %v772
  %v774 = vmul.f32 %v769, %v773
  %vm775 = vweird.f32 %v698
  %vm776 = vweird.f32 %v769
  %vm777 = vmor %vm775, %vm776
  %v778 = vsel %vm777, %v769, %v774
  %v779 = vmul.f32 %v683, %v708
  %v780 = vmul.f32 %v684, %v718
  %v781 = vmul.f32 %v685, %v728
  %v782 = vmul.f32 %v686, %v738
  %v783 = vmul.f32 %v687, %v748
  %v784 = vmul.f32 %v688, %v758
  %v785 = vmul.f32 %v689, %v768
  %v786 = vmul.f32 %v690, %v778
  %v787 = vld [vmem:[%s3] sm:$0xff]
  %v788 = vld [vmem:[%s3 + $0x8] sm:$0xff]
  %v789 = vld [vmem:[%s3 + $0x10] sm:$0xff]
  %v790 = vld [vmem:[%s3 + $0x18] sm:$0xff]
  %v791 = vld [vmem:[%s3 + $0x20] sm:$0xff]
  %v792 = vld [vmem:[%s3 + $0x28] sm:$0xff]
  %v793 = vld [vmem:[%s3 + $0x30] sm:$0xff]
  %v794 = vld [vmem:[%s3 + $0x38] sm:$0xff]
  %v795 = vmul.f32 %v651, %v779
  %v796 = vmul.f32 %v652, %v780
  %v797 = vmul.f32 %v653, %v781
  %v798 = vmul.f32 %v654, %v782
  %v799 = vmul.f32 %v655, %v783
  %v800 = vmul.f32 %v656, %v784
  %v801 = vmul.f32 %v657, %v785
  %v802 = vmul.f32 %v658, %v786
  %v803 = vsub.f32 %v787, %v795
  %v804 = vsub.f32 %v788, %v796
  %v805 = vsub.f32 %v789, %v797
  %v806 = vsub.f32 %v790, %v798
  %v807 = vsub.f32 %v791, %v799
  %v808 = vsub.f32 %v792, %v800
  %v809 = vsub.f32 %v793, %v801
  %v810 = vsub.f32 %v794, %v802
  %812 = vset.pattern.permute.xlu0 0
  %813 = vperm.xlu0 %812, %v779
  %v814 = vpop.permute.xlu0 %813
  %817 = vset.pattern.permute.xlu0 0
  %818 = vperm.xlu0 %817, %v780
  %v819 = vpop.permute.xlu0 %818
  %822 = vset.pattern.permute.xlu0 0
  %823 = vperm.xlu0 %822, %v781
  %v824 = vpop.permute.xlu0 %823
  %827 = vset.pattern.permute.xlu0 0
  %828 = vperm.xlu0 %827, %v782
  %v829 = vpop.permute.xlu0 %828
  %832 = vset.pattern.permute.xlu0 0
  %833 = vperm.xlu0 %832, %v783
  %v834 = vpop.permute.xlu0 %833
  %837 = vset.pattern.permute.xlu0 0
  %838 = vperm.xlu0 %837, %v784
  %v839 = vpop.permute.xlu0 %838
  %842 = vset.pattern.permute.xlu0 0
  %843 = vperm.xlu0 %842, %v785
  %v844 = vpop.permute.xlu0 %843
  %847 = vset.pattern.permute.xlu0 0
  %848 = vperm.xlu0 %847, %v786
  %v849 = vpop.permute.xlu0 %848
  %v851 = vmul.f32 %v221, %v814
  %v852 = vmul.f32 %v250, %v814
  %v853 = vmul.f32 %v279, %v814
  %v854 = vmul.f32 %v308, %v814
  %v855 = vmul.f32 %v337, %v814
  %v856 = vmul.f32 %v366, %v814
  %v857 = vmul.f32 %v395, %v814
  %v858 = vmul.f32 %v424, %v814
  %v859 = vmul.f32 %v223, %v819
  %v860 = vmul.f32 %v252, %v819
  %v861 = vmul.f32 %v281, %v819
  %v862 = vmul.f32 %v310, %v819
  %v863 = vmul.f32 %v339, %v819
  %v864 = vmul.f32 %v368, %v819
  %v865 = vmul.f32 %v397, %v819
  %v866 = vmul.f32 %v426, %v819
  %v867 = vmul.f32 %v226, %v824
  %v868 = vmul.f32 %v255, %v824
  %v869 = vmul.f32 %v284, %v824
  %v870 = vmul.f32 %v313, %v824
  %v871 = vmul.f32 %v342, %v824
  %v872 = vmul.f32 %v371, %v824
  %v873 = vmul.f32 %v400, %v824
  %v874 = vmul.f32 %v429, %v824
  %v875 = vmul.f32 %v228, %v829
  %v876 = vmul.f32 %v257, %v829
  %v877 = vmul.f32 %v286, %v829
  %v878 = vmul.f32 %v315, %v829
  %v879 = vmul.f32 %v344, %v829
  %v880 = vmul.f32 %v373, %v829
  %v881 = vmul.f32 %v402, %v829
  %v882 = vmul.f32 %v431, %v829
  %v883 = vmul.f32 %v231, %v834
  %v884 = vmul.f32 %v260, %v834
  %v885 = vmul.f32 %v289, %v834
  %v886 = vmul.f32 %v318, %v834
  %v887 = vmul.f32 %v347, %v834
  %v888 = vmul.f32 %v376, %v834
  %v889 = vmul.f32 %v405, %v834
  %v890 = vmul.f32 %v434, %v834
  %v891 = vmul.f32 %v233, %v839
  %v892 = vmul.f32 %v262, %v839
  %v893 = vmul.f32 %v291, %v839
  %v894 = vmul.f32 %v320, %v839
  %v895 = vmul.f32 %v349, %v839
  %v896 = vmul.f32 %v378, %v839
  %v897 = vmul.f32 %v407, %v839
  %v898 = vmul.f32 %v436, %v839
  %v899 = vmul.f32 %v236, %v844
  %v900 = vmul.f32 %v265, %v844
  %v901 = vmul.f32 %v294, %v844
  %v902 = vmul.f32 %v323, %v844
  %v903 = vmul.f32 %v352, %v844
  %v904 = vmul.f32 %v381, %v844
  %v905 = vmul.f32 %v410, %v844
  %v906 = vmul.f32 %v439, %v844
  %v907 = vmul.f32 %v238, %v849
  %v908 = vmul.f32 %v267, %v849
  %v909 = vmul.f32 %v296, %v849
  %v910 = vmul.f32 %v325, %v849
  %v911 = vmul.f32 %v354, %v849
  %v912 = vmul.f32 %v383, %v849
  %v913 = vmul.f32 %v412, %v849
  %v914 = vmul.f32 %v441, %v849
  %916 = vset.pattern.permute.xlu0 0
  %917 = vperm.xlu0 %916, %v803
  %v918 = vpop.permute.xlu0 %917
  %921 = vset.pattern.permute.xlu0 0
  %922 = vperm.xlu0 %921, %v804
  %v923 = vpop.permute.xlu0 %922
  %926 = vset.pattern.permute.xlu0 0
  %927 = vperm.xlu0 %926, %v805
  %v928 = vpop.permute.xlu0 %927
  %931 = vset.pattern.permute.xlu0 0
  %932 = vperm.xlu0 %931, %v806
  %v933 = vpop.permute.xlu0 %932
  %936 = vset.pattern.permute.xlu0 0
  %937 = vperm.xlu0 %936, %v807
  %v938 = vpop.permute.xlu0 %937
  %941 = vset.pattern.permute.xlu0 0
  %942 = vperm.xlu0 %941, %v808
  %v943 = vpop.permute.xlu0 %942
  %946 = vset.pattern.permute.xlu0 0
  %947 = vperm.xlu0 %946, %v809
  %v948 = vpop.permute.xlu0 %947
  %951 = vset.pattern.permute.xlu0 0
  %952 = vperm.xlu0 %951, %v810
  %v953 = vpop.permute.xlu0 %952
  %v955 = vadd.f32 %v851, %v918
  %v956 = vadd.f32 %v852, %v918
  %v957 = vadd.f32 %v853, %v918
  %v958 = vadd.f32 %v854, %v918
  %v959 = vadd.f32 %v855, %v918
  %v960 = vadd.f32 %v856, %v918
  %v961 = vadd.f32 %v857, %v918
  %v962 = vadd.f32 %v858, %v918
  %v963 = vadd.f32 %v859, %v923
  %v964 = vadd.f32 %v860, %v923
  %v965 = vadd.f32 %v861, %v923
  %v966 = vadd.f32 %v862, %v923
  %v967 = vadd.f32 %v863, %v923
  %v968 = vadd.f32 %v864, %v923
  %v969 = vadd.f32 %v865, %v923
  %v970 = vadd.f32 %v866, %v923
  %v971 = vadd.f32 %v867, %v928
  %v972 = vadd.f32 %v868, %v928
  %v973 = vadd.f32 %v869, %v928
  %v974 = vadd.f32 %v870, %v928
  %v975 = vadd.f32 %v871, %v928
  %v976 = vadd.f32 %v872, %v928
  %v977 = vadd.f32 %v873, %v928
  %v978 = vadd.f32 %v874, %v928
  %v979 = vadd.f32 %v875, %v933
  %v980 = vadd.f32 %v876, %v933
  %v981 = vadd.f32 %v877, %v933
  %v982 = vadd.f32 %v878, %v933
  %v983 = vadd.f32 %v879, %v933
  %v984 = vadd.f32 %v880, %v933
  %v985 = vadd.f32 %v881, %v933
  %v986 = vadd.f32 %v882, %v933
  %v987 = vadd.f32 %v883, %v938
  %v988 = vadd.f32 %v884, %v938
  %v989 = vadd.f32 %v885, %v938
  %v990 = vadd.f32 %v886, %v938
  %v991 = vadd.f32 %v887, %v938
  %v992 = vadd.f32 %v888, %v938
  %v993 = vadd.f32 %v889, %v938
  %v994 = vadd.f32 %v890, %v938
  %v995 = vadd.f32 %v891, %v943
  %v996 = vadd.f32 %v892, %v943
  %v997 = vadd.f32 %v893, %v943
  %v998 = vadd.f32 %v894, %v943
  %v999 = vadd.f32 %v895, %v943
  %v1000 = vadd.f32 %v896, %v943
  %v1001 = vadd.f32 %v897, %v943
  %v1002 = vadd.f32 %v898, %v943
  %v1003 = vadd.f32 %v899, %v948
  %v1004 = vadd.f32 %v900, %v948
  %v1005 = vadd.f32 %v901, %v948
  %v1006 = vadd.f32 %v902, %v948
  %v1007 = vadd.f32 %v903, %v948
  %v1008 = vadd.f32 %v904, %v948
  %v1009 = vadd.f32 %v905, %v948
  %v1010 = vadd.f32 %v906, %v948
  %v1011 = vadd.f32 %v907, %v953
  %v1012 = vadd.f32 %v908, %v953
  %v1013 = vadd.f32 %v909, %v953
  %v1014 = vadd.f32 %v910, %v953
  %v1015 = vadd.f32 %v911, %v953
  %v1016 = vadd.f32 %v912, %v953
  %v1017 = vadd.f32 %v913, %v953
  %v1018 = vadd.f32 %v914, %v953
  %1019 = vst [vmem:[%s4] sm:$0xff] %v955
  %1020 = vst [vmem:[%s4 + $0x8] sm:$0xff] %v956
  %1021 = vst [vmem:[%s4 + $0x10] sm:$0xff] %v957
  %1022 = vst [vmem:[%s4 + $0x18] sm:$0xff] %v958
  %1023 = vst [vmem:[%s4 + $0x20] sm:$0xff] %v959
  %1024 = vst [vmem:[%s4 + $0x28] sm:$0xff] %v960
  %1025 = vst [vmem:[%s4 + $0x30] sm:$0xff] %v961
  %1026 = vst [vmem:[%s4 + $0x38] sm:$0xff] %v962
  %1027 = vst [vmem:[%s4 + $0x40] sm:$0xff] %v963
  %1028 = vst [vmem:[%s4 + $0x48] sm:$0xff] %v964
  %1029 = vst [vmem:[%s4 + $0x50] sm:$0xff] %v965
  %1030 = vst [vmem:[%s4 + $0x58] sm:$0xff] %v966
  %1031 = vst [vmem:[%s4 + $0x60] sm:$0xff] %v967
  %1032 = vst [vmem:[%s4 + $0x68] sm:$0xff] %v968
  %1033 = vst [vmem:[%s4 + $0x70] sm:$0xff] %v969
  %1034 = vst [vmem:[%s4 + $0x78] sm:$0xff] %v970
  %1035 = vst [vmem:[%s4 + $0x80] sm:$0xff] %v971
  %1036 = vst [vmem:[%s4 + $0x88] sm:$0xff] %v972
  %1037 = vst [vmem:[%s4 + $0x90] sm:$0xff] %v973
  %1038 = vst [vmem:[%s4 + $0x98] sm:$0xff] %v974
  %1039 = vst [vmem:[%s4 + $0xa0] sm:$0xff] %v975
  %1040 = vst [vmem:[%s4 + $0xa8] sm:$0xff] %v976
  %1041 = vst [vmem:[%s4 + $0xb0] sm:$0xff] %v977
  %1042 = vst [vmem:[%s4 + $0xb8] sm:$0xff] %v978
  %1043 = vst [vmem:[%s4 + $0xc0] sm:$0xff] %v979
  %1044 = vst [vmem:[%s4 + $0xc8] sm:$0xff] %v980
  %1045 = vst [vmem:[%s4 + $0xd0] sm:$0xff] %v981
  %1046 = vst [vmem:[%s4 + $0xd8] sm:$0xff] %v982
  %1047 = vst [vmem:[%s4 + $0xe0] sm:$0xff] %v983
  %1048 = vst [vmem:[%s4 + $0xe8] sm:$0xff] %v984
  %1049 = vst [vmem:[%s4 + $0xf0] sm:$0xff] %v985
  %1050 = vst [vmem:[%s4 + $0xf8] sm:$0xff] %v986
  %1051 = vst [vmem:[%s4 + $0x100] sm:$0xff] %v987
  %1052 = vst [vmem:[%s4 + $0x108] sm:$0xff] %v988
  %1053 = vst [vmem:[%s4 + $0x110] sm:$0xff] %v989
  %1054 = vst [vmem:[%s4 + $0x118] sm:$0xff] %v990
  %1055 = vst [vmem:[%s4 + $0x120] sm:$0xff] %v991
  %1056 = vst [vmem:[%s4 + $0x128] sm:$0xff] %v992
  %1057 = vst [vmem:[%s4 + $0x130] sm:$0xff] %v993
  %1058 = vst [vmem:[%s4 + $0x138] sm:$0xff] %v994
  %1059 = vst [vmem:[%s4 + $0x140] sm:$0xff] %v995
  %1060 = vst [vmem:[%s4 + $0x148] sm:$0xff] %v996
  %1061 = vst [vmem:[%s4 + $0x150] sm:$0xff] %v997
  %1062 = vst [vmem:[%s4 + $0x158] sm:$0xff] %v998
  %1063 = vst [vmem:[%s4 + $0x160] sm:$0xff] %v999
  %1064 = vst [vmem:[%s4 + $0x168] sm:$0xff] %v1000
  %1065 = vst [vmem:[%s4 + $0x170] sm:$0xff] %v1001
  %1066 = vst [vmem:[%s4 + $0x178] sm:$0xff] %v1002
  %1067 = vst [vmem:[%s4 + $0x180] sm:$0xff] %v1003
  %1068 = vst [vmem:[%s4 + $0x188] sm:$0xff] %v1004
  %1069 = vst [vmem:[%s4 + $0x190] sm:$0xff] %v1005
  %1070 = vst [vmem:[%s4 + $0x198] sm:$0xff] %v1006
  %1071 = vst [vmem:[%s4 + $0x1a0] sm:$0xff] %v1007
  %1072 = vst [vmem:[%s4 + $0x1a8] sm:$0xff] %v1008
  %1073 = vst [vmem:[%s4 + $0x1b0] sm:$0xff] %v1009
  %1074 = vst [vmem:[%s4 + $0x1b8] sm:$0xff] %v1010
  %1075 = vst [vmem:[%s4 + $0x1c0] sm:$0xff] %v1011
  %1076 = vst [vmem:[%s4 + $0x1c8] sm:$0xff] %v1012
  %1077 = vst [vmem:[%s4 + $0x1d0] sm:$0xff] %v1013
  %1078 = vst [vmem:[%s4 + $0x1d8] sm:$0xff] %v1014
  %1079 = vst [vmem:[%s4 + $0x1e0] sm:$0xff] %v1015
  %1080 = vst [vmem:[%s4 + $0x1e8] sm:$0xff] %v1016
  %1081 = vst [vmem:[%s4 + $0x1f0] sm:$0xff] %v1017
  %1082 = vst [vmem:[%s4 + $0x1f8] sm:$0xff] %v1018
  // Predicated region
  $region18: #{mapping_forward.1} parent=0 // pred_check
    _
  $region19: #{mapping_forward.1} parent=0 // pred_check_branch
    %1084 = sbr.rel (0) target = $region21
  $region20: #{mapping_forward.1} parent=0 // pred_region
    _
  $region21: #{mapping_forward.1} parent=0 // pred_fallthru
    _
  // Predicated region
  $region22: #{mapping_forward.1} parent=0 // pred_check
    _
  $region23: #{mapping_forward.1} parent=0 // pred_check_branch
    %1086 = sbr.rel (0) target = $region25
  $region24: #{mapping_forward.1} parent=0 // pred_region
    _
  $region25: #{mapping_forward.1} parent=0 // pred_fallthru
    _

</llo_original>
